<compile_context>
chip_gen: v7x
topology: tpu7x:2x2x1
jax: 0.10.0
libtpu: 0.0.40
codegen_flags: <defaults>
</compile_context>

<pallas_src>
import functools

import jax
import jax.numpy as jnp
import numpy as np
from jax.experimental import pallas as pl
from jax.experimental.pallas import tpu as pltpu


_SUB = 128        # inner sub-tile width: one 128-lane batch slab per inner step
_MAX_TILE = 1024  # max rows handled per outer grid step (<= 8 unrolled sub-tiles)


def _round_up(x, m):
    return (x + m - 1) // m * m


def _swish(v):
    # swish(v) = v * sigmoid(v); exp (and the reciprocal) ride the EUP slot.
    return v * pl.reciprocal(1.0 + jnp.exp(-v), approx=False)


def _choose_tiling(batch):
    """Returns (padded_batch, rows_per_grid_step, inner_steps_per_grid_step)."""
    bp = _round_up(max(batch, 1), _SUB)
    n_sub = bp // _SUB
    # Amortize per-grid-step pipeline overhead with a big tile, but keep >= 2
    # grid steps when there is enough work (v7x has two TensorCores).
    n_inner = min(_MAX_TILE // _SUB, max(1, n_sub // 2))
    n_sub = _round_up(n_sub, n_inner)
    return n_sub * _SUB, n_inner * _SUB, n_inner


# --------------------------------------------------------------------------
# Kernel (feature-major: activations are [features, batch_sub_tile])
# --------------------------------------------------------------------------
def resnet_kernel(x_ref, wx_ref, w2_ref, w3h_ref, w4_ref, w5h_ref, w6_ref,
                  b2_ref, b4_ref, b6_ref, o_ref, *, num_neurons, n_inner, sub):
    N = num_neurons
    f32 = jnp.float32

    # Statically unrolled loop over 128-lane batch sub-tiles: static slice
    # offsets, small per-iteration vreg live set, no per-sub-tile grid
    # bookkeeping.  Weight/bias refs are indexed inside the loop; the
    # compiler keeps what fits in vregs and re-loads the rest from VMEM.
    for j in range(n_inner):
        cols = slice(j * sub, (j + 1) * sub)
        x = x_ref[:, cols]                                        # [in_pad, sub]

        # Fused x-side projections of layers 1 / 3 / 5 (+ their biases via the
        # ones-row of the augmented input): one MXU pass, K = in_pad.
        xp = jnp.dot(wx_ref[...], x, preferred_element_type=f32)  # [3N, sub]

        # block1
        h = _swish(xp[0:N, :])
        h = _swish(jnp.dot(w2_ref[...], h, preferred_element_type=f32)
                   + b2_ref[...])
        # block2: cat([h, x]) @ W3^T == W3h @ h + (W3x @ x + b3)  (xp segment)
        h = _swish(jnp.dot(w3h_ref[...], h, preferred_element_type=f32)
                   + xp[N:2 * N, :])
        h = _swish(jnp.dot(w4_ref[...], h, preferred_element_type=f32)
                   + b4_ref[...])
        # layer_after_block on cat([h, x])
        h = _swish(jnp.dot(w5h_ref[...], h, preferred_element_type=f32)
                   + xp[2 * N:3 * N, :])
        # layer_output (no activation); rows padded to a multiple of 8
        out = jnp.dot(w6_ref[...], h, preferred_element_type=f32) + b6_ref[...]

        o_ref[:, cols] = out.astype(o_ref.dtype)


# --------------------------------------------------------------------------
# Parameter construction / one-time preparation
# --------------------------------------------------------------------------
def make_params(key, in_features, out_features, num_neurons, dtype=jnp.float32):
    """Deterministic PyTorch-style init: U(-1/sqrt(fan_in), 1/sqrt(fan_in))."""
    shapes = {
        "w1": (num_neurons, in_features), "b1": (num_neurons,),
        "w2": (num_neurons, num_neurons), "b2": (num_neurons,),
        "w3": (num_neurons, in_features + num_neurons), "b3": (num_neurons,),
        "w4": (num_neurons, num_neurons), "b4": (num_neurons,),
        "w5": (num_neurons, num_neurons + in_features), "b5": (num_neurons,),
        "w6": (out_features, num_neurons), "b6": (out_features,),
    }
    params = {}
    keys = jax.random.split(key, len(shapes))
    for (name, shape), k in zip(shapes.items(), keys):
        fan_in = shape[-1] if name.startswith("w") else shapes["w" + name[1]][-1]
        bound = 1.0 / np.sqrt(fan_in)
        params[name] = jax.random.uniform(k, shape, dtype, -bound, bound)
    return params


def prepare_params(params, num_neurons):
    """One-time prep for the feature-major kernel.

    - Weights keep their PyTorch [fan_out, fan_in] orientation (they are the
      LHS of the feature-major matmuls), concat-weights are split into h/x
      parts, and the x-parts of layers 1/3/5 are fused (with their biases
      folded via a ones-row) into a single [3N, in_pad] projection.
    - The output head is only sublane-padded (to a multiple of 8 rows).
    - b2 / b4 / b6 are pre-broadcast to the inner sub-tile width so the kernel
      adds them with no broadcast op."""
    N = num_neurons
    f32 = jnp.float32
    in_features = params["w1"].shape[1]
    out_features = params["w6"].shape[0]
    in_pad = _round_up(in_features + 1, 8)       # x rows + ones row + zero rows
    out_pad = _round_up(out_features, 8)

    def xseg(w, b):                              # [N, in], [N] -> [N, in_pad]
        seg = jnp.concatenate([w, b[:, None]], axis=1)
        return jnp.pad(seg, ((0, 0), (0, in_pad - (in_features + 1))))

    w3h, w3x = params["w3"][:, :N], params["w3"][:, N:]   # cat order: [h, x]
    w5h, w5x = params["w5"][:, :N], params["w5"][:, N:]

    wx = jnp.concatenate([xseg(params["w1"], params["b1"]),
                          xseg(w3x, params["b3"]),
                          xseg(w5x, params["b5"])], axis=0).astype(f32)

    w6 = jnp.zeros((out_pad, N), f32).at[:out_features].set(params["w6"])
    b6 = jnp.zeros((out_pad,), f32).at[:out_features].set(params["b6"])

    def lane_bcast(b):                           # pre-broadcast to sub width
        return jnp.tile(b.astype(f32)[:, None], (1, _SUB))

    return {
        "wx": wx,                                # [3N, in_pad]
        "w2": params["w2"].astype(f32),          # [N, N]
        "w3h": w3h.astype(f32),                  # [N, N]
        "w4": params["w4"].astype(f32),          # [N, N]
        "w5h": w5h.astype(f32),                  # [N, N]
        "w6": w6,                                # [out_pad, N]
        "b2": lane_bcast(params["b2"]),          # [N, _SUB]
        "b4": lane_bcast(params["b4"]),          # [N, _SUB]
        "b6": lane_bcast(b6),                    # [out_pad, _SUB]
    }


# --------------------------------------------------------------------------
# Forward
# --------------------------------------------------------------------------
@functools.partial(jax.jit, static_argnames="out_features")
def resnet_forward_pallas(x, prepared, out_features):
    B, in_features = x.shape
    N = prepared["w2"].shape[0]
    in_pad = prepared["wx"].shape[1]
    out_pad = prepared["w6"].shape[0]

    Bp, tb, n_inner = _choose_tiling(B)

    # Feature-major augmented input [in_pad, Bp]: a row of ones folds the
    # layer-1/3/5 biases into the fused matmul; padded rows/cols are zero.
    xt = jnp.concatenate(
        [x.T.astype(jnp.float32), jnp.ones((1, B), jnp.float32)], axis=0)
    xt = jnp.pad(xt, ((0, in_pad - (in_features + 1)), (0, Bp - B)))

    weights = (prepared["wx"], prepared["w2"], prepared["w3h"], prepared["w4"],
               prepared["w5h"], prepared["w6"], prepared["b2"], prepared["b4"],
               prepared["b6"])

    # Weights / biases: same block every grid step -> stay resident in VMEM.
    resident = lambda a: pl.BlockSpec(a.shape, lambda i: (0, 0))

    kernel = functools.partial(resnet_kernel, num_neurons=N,
                               n_inner=n_inner, sub=_SUB)

    out_t = pl.pallas_call(
        kernel,
        out_shape=jax.ShapeDtypeStruct((out_pad, Bp), jnp.float32),
        grid_spec=pl.GridSpec(
            grid=(Bp // tb,),
            in_specs=[pl.BlockSpec((in_pad, tb), lambda i: (0, i))]
                     + [resident(w) for w in weights],
            out_specs=pl.BlockSpec((out_pad, tb), lambda i: (0, i)),
        ),
        compiler_params=pltpu.CompilerParams(
            # Batch steps are independent -> sharded across v7x's 2 TCs.
            dimension_semantics=("parallel",),
        ),
    )(xt, *weights)

    # Back to the PyTorch row-major [B, out_features] view (tiny arrays).
    return out_t[:out_features, :B].T


def resnet_forward_ref(x, params, precision=None):
    """Pure-JAX reference matching the PyTorch forward exactly."""
    sw = lambda v: v * jax.nn.sigmoid(v)
    mm = lambda a, w: jnp.dot(a, w.T, precision=precision)
    h = sw(mm(x, params["w1"]) + params["b1"])
    h = sw(mm(h, params["w2"]) + params["b2"])
    h = jnp.concatenate([h, x], axis=-1)
    h = sw(mm(h, params["w3"]) + params["b3"])
    h = sw(mm(h, params["w4"]) + params["b4"])
    h = jnp.concatenate([h, x], axis=-1)
    h = sw(mm(h, params["w5"]) + params["b5"])
    return mm(h, params["w6"]) + params["b6"]


if __name__ == "__main__":
    in_features, out_features, num_neurons = 4, 2, 32

    key = jax.random.PRNGKey(0)
    k_p, k1, k2, k3 = jax.random.split(key, 4)
    params = make_params(k_p, in_features, out_features, num_neurons)
    prepared = prepare_params(params, num_neurons)

    def check(x):
        out = jax.block_until_ready(
            resnet_forward_pallas(x, prepared, out_features=out_features))
        assert out.shape == (x.shape[0], out_features)
        ref_hi = resnet_forward_ref(x, params,
                                    precision=jax.lax.Precision.HIGHEST)
        ref_lo = resnet_forward_ref(x, params)  # backend-default matmul precision
        # Tolerance scales with the backend's default f32-matmul rounding, so
        # the check stays tight on exact-f32 paths and fair on bf16-pass paths
        # while still catching any structural error (those are O(0.1)).
        noise = float(jnp.max(jnp.abs(ref_hi - ref_lo)))
        tol = max(1e-3, 8.0 * noise)
        np.testing.assert_allclose(np.asarray(out), np.asarray(ref_hi),
                                   rtol=tol, atol=tol)

    # Single grid step.
    check(jax.random.normal(k1, (8, in_features), jnp.float32))
    # Non-multiple batch: padding + 3-step pipelined grid.
    check(jax.random.normal(k2, (300, in_features), jnp.float32))
    # Large batch: 4 parallel grid steps x 8 unrolled inner sub-tiles each.
    check(jax.random.normal(k3, (4096, in_features), jnp.float32))

    print("KERNEL_OK")
</pallas_src>

<mosaic_0001>
module attributes {stable_mosaic.version = 11 : i64} {
  func.func @resnet_kernel(%arg0: i32, %arg1: memref<8x128xf32, #tpu.memory_space<vmem>>, %arg2: memref<96x8xf32, #tpu.memory_space<vmem>>, %arg3: memref<32x32xf32, #tpu.memory_space<vmem>>, %arg4: memref<32x32xf32, #tpu.memory_space<vmem>>, %arg5: memref<32x32xf32, #tpu.memory_space<vmem>>, %arg6: memref<32x32xf32, #tpu.memory_space<vmem>>, %arg7: memref<8x32xf32, #tpu.memory_space<vmem>>, %arg8: memref<32x128xf32, #tpu.memory_space<vmem>>, %arg9: memref<32x128xf32, #tpu.memory_space<vmem>>, %arg10: memref<8x128xf32, #tpu.memory_space<vmem>>, %arg11: memref<8x128xf32, #tpu.memory_space<vmem>>) attributes {dimension_semantics = [#tpu.dimension_semantics<parallel>], iteration_bounds = array<i64: 1>, scalar_prefetch = 0 : i64, scratch_operands = 0 : i64, tpu.core_type = #tpu.core_type<tc>, window_params = [{transform_indices = @transform_0, window_bounds = array<i64: 8, 128>}, {pipeline_mode = #tpu.pipeline_mode<synchronous>, transform_indices = @transform_1, window_bounds = array<i64: 96, 8>}, {pipeline_mode = #tpu.pipeline_mode<synchronous>, transform_indices = @transform_2, window_bounds = array<i64: 32, 32>}, {pipeline_mode = #tpu.pipeline_mode<synchronous>, transform_indices = @transform_3, window_bounds = array<i64: 32, 32>}, {pipeline_mode = #tpu.pipeline_mode<synchronous>, transform_indices = @transform_4, window_bounds = array<i64: 32, 32>}, {pipeline_mode = #tpu.pipeline_mode<synchronous>, transform_indices = @transform_5, window_bounds = array<i64: 32, 32>}, {pipeline_mode = #tpu.pipeline_mode<synchronous>, transform_indices = @transform_6, window_bounds = array<i64: 8, 32>}, {pipeline_mode = #tpu.pipeline_mode<synchronous>, transform_indices = @transform_7, window_bounds = array<i64: 32, 128>}, {pipeline_mode = #tpu.pipeline_mode<synchronous>, transform_indices = @transform_8, window_bounds = array<i64: 32, 128>}, {pipeline_mode = #tpu.pipeline_mode<synchronous>, transform_indices = @transform_9, window_bounds = array<i64: 8, 128>}, {transform_indices = @transform_10, window_bounds = array<i64: 8, 128>}]} {
    %c0 = arith.constant 0 : index
    %c0_0 = arith.constant 0 : index
    %0 = vector.load %arg1[%c0, %c0_0] : memref<8x128xf32, #tpu.memory_space<vmem>>, vector<8x128xf32>
    %c0_1 = arith.constant 0 : index
    %c0_2 = arith.constant 0 : index
    %1 = vector.load %arg2[%c0_1, %c0_2] : memref<96x8xf32, #tpu.memory_space<vmem>>, vector<96x8xf32>
    %cst = arith.constant dense<0.000000e+00> : vector<96x128xf32>
    %2 = tpu.matmul %1, %0, %cst {dimension_numbers = #tpu.dot_dimension_numbers<[1], [0], [0], [1], [0, 0, 1, 1], [], []>} : vector<96x8xf32>, vector<8x128xf32>, vector<96x128xf32> -> vector<96x128xf32>
    %3 = vector.extract_strided_slice %2 {offsets = [0, 0], sizes = [32, 128], strides = [1, 1]} : vector<96x128xf32> to vector<32x128xf32>
    %cst_3 = arith.constant 0.000000e+00 : f32
    %4 = vector.broadcast %cst_3 : f32 to vector<32x128xf32>
    %5 = arith.subf %4, %3 : vector<32x128xf32>
    %6 = math.exp %5 : vector<32x128xf32>
    %cst_4 = arith.constant 1.000000e+00 : f32
    %7 = vector.broadcast %cst_4 : f32 to vector<32x128xf32>
    %8 = arith.addf %7, %6 : vector<32x128xf32>
    %9 = tpu.reciprocal %8 : vector<32x128xf32> -> vector<32x128xf32>
    %10 = arith.mulf %3, %9 : vector<32x128xf32>
    %c0_5 = arith.constant 0 : index
    %c0_6 = arith.constant 0 : index
    %11 = vector.load %arg3[%c0_5, %c0_6] : memref<32x32xf32, #tpu.memory_space<vmem>>, vector<32x32xf32>
    %cst_7 = arith.constant dense<0.000000e+00> : vector<32x128xf32>
    %12 = tpu.matmul %11, %10, %cst_7 {dimension_numbers = #tpu.dot_dimension_numbers<[1], [0], [0], [1], [0, 0, 1, 1], [], []>} : vector<32x32xf32>, vector<32x128xf32>, vector<32x128xf32> -> vector<32x128xf32>
    %c0_8 = arith.constant 0 : index
    %c0_9 = arith.constant 0 : index
    %13 = vector.load %arg8[%c0_8, %c0_9] : memref<32x128xf32, #tpu.memory_space<vmem>>, vector<32x128xf32>
    %14 = arith.addf %12, %13 : vector<32x128xf32>
    %cst_10 = arith.constant 0.000000e+00 : f32
    %15 = vector.broadcast %cst_10 : f32 to vector<32x128xf32>
    %16 = arith.subf %15, %14 : vector<32x128xf32>
    %17 = math.exp %16 : vector<32x128xf32>
    %cst_11 = arith.constant 1.000000e+00 : f32
    %18 = vector.broadcast %cst_11 : f32 to vector<32x128xf32>
    %19 = arith.addf %18, %17 : vector<32x128xf32>
    %20 = tpu.reciprocal %19 : vector<32x128xf32> -> vector<32x128xf32>
    %21 = arith.mulf %14, %20 : vector<32x128xf32>
    %c0_12 = arith.constant 0 : index
    %c0_13 = arith.constant 0 : index
    %22 = vector.load %arg4[%c0_12, %c0_13] : memref<32x32xf32, #tpu.memory_space<vmem>>, vector<32x32xf32>
    %cst_14 = arith.constant dense<0.000000e+00> : vector<32x128xf32>
    %23 = tpu.matmul %22, %21, %cst_14 {dimension_numbers = #tpu.dot_dimension_numbers<[1], [0], [0], [1], [0, 0, 1, 1], [], []>} : vector<32x32xf32>, vector<32x128xf32>, vector<32x128xf32> -> vector<32x128xf32>
    %24 = vector.extract_strided_slice %2 {offsets = [32, 0], sizes = [32, 128], strides = [1, 1]} : vector<96x128xf32> to vector<32x128xf32>
    %25 = arith.addf %23, %24 : vector<32x128xf32>
    %cst_15 = arith.constant 0.000000e+00 : f32
    %26 = vector.broadcast %cst_15 : f32 to vector<32x128xf32>
    %27 = arith.subf %26, %25 : vector<32x128xf32>
    %28 = math.exp %27 : vector<32x128xf32>
    %cst_16 = arith.constant 1.000000e+00 : f32
    %29 = vector.broadcast %cst_16 : f32 to vector<32x128xf32>
    %30 = arith.addf %29, %28 : vector<32x128xf32>
    %31 = tpu.reciprocal %30 : vector<32x128xf32> -> vector<32x128xf32>
    %32 = arith.mulf %25, %31 : vector<32x128xf32>
    %c0_17 = arith.constant 0 : index
    %c0_18 = arith.constant 0 : index
    %33 = vector.load %arg5[%c0_17, %c0_18] : memref<32x32xf32, #tpu.memory_space<vmem>>, vector<32x32xf32>
    %cst_19 = arith.constant dense<0.000000e+00> : vector<32x128xf32>
    %34 = tpu.matmul %33, %32, %cst_19 {dimension_numbers = #tpu.dot_dimension_numbers<[1], [0], [0], [1], [0, 0, 1, 1], [], []>} : vector<32x32xf32>, vector<32x128xf32>, vector<32x128xf32> -> vector<32x128xf32>
    %c0_20 = arith.constant 0 : index
    %c0_21 = arith.constant 0 : index
    %35 = vector.load %arg9[%c0_20, %c0_21] : memref<32x128xf32, #tpu.memory_space<vmem>>, vector<32x128xf32>
    %36 = arith.addf %34, %35 : vector<32x128xf32>
    %cst_22 = arith.constant 0.000000e+00 : f32
    %37 = vector.broadcast %cst_22 : f32 to vector<32x128xf32>
    %38 = arith.subf %37, %36 : vector<32x128xf32>
    %39 = math.exp %38 : vector<32x128xf32>
    %cst_23 = arith.constant 1.000000e+00 : f32
    %40 = vector.broadcast %cst_23 : f32 to vector<32x128xf32>
    %41 = arith.addf %40, %39 : vector<32x128xf32>
    %42 = tpu.reciprocal %41 : vector<32x128xf32> -> vector<32x128xf32>
    %43 = arith.mulf %36, %42 : vector<32x128xf32>
    %c0_24 = arith.constant 0 : index
    %c0_25 = arith.constant 0 : index
    %44 = vector.load %arg6[%c0_24, %c0_25] : memref<32x32xf32, #tpu.memory_space<vmem>>, vector<32x32xf32>
    %cst_26 = arith.constant dense<0.000000e+00> : vector<32x128xf32>
    %45 = tpu.matmul %44, %43, %cst_26 {dimension_numbers = #tpu.dot_dimension_numbers<[1], [0], [0], [1], [0, 0, 1, 1], [], []>} : vector<32x32xf32>, vector<32x128xf32>, vector<32x128xf32> -> vector<32x128xf32>
    %46 = vector.extract_strided_slice %2 {offsets = [64, 0], sizes = [32, 128], strides = [1, 1]} : vector<96x128xf32> to vector<32x128xf32>
    %47 = arith.addf %45, %46 : vector<32x128xf32>
    %cst_27 = arith.constant 0.000000e+00 : f32
    %48 = vector.broadcast %cst_27 : f32 to vector<32x128xf32>
    %49 = arith.subf %48, %47 : vector<32x128xf32>
    %50 = math.exp %49 : vector<32x128xf32>
    %cst_28 = arith.constant 1.000000e+00 : f32
    %51 = vector.broadcast %cst_28 : f32 to vector<32x128xf32>
    %52 = arith.addf %51, %50 : vector<32x128xf32>
    %53 = tpu.reciprocal %52 : vector<32x128xf32> -> vector<32x128xf32>
    %54 = arith.mulf %47, %53 : vector<32x128xf32>
    %c0_29 = arith.constant 0 : index
    %c0_30 = arith.constant 0 : index
    %55 = vector.load %arg7[%c0_29, %c0_30] : memref<8x32xf32, #tpu.memory_space<vmem>>, vector<8x32xf32>
    %cst_31 = arith.constant dense<0.000000e+00> : vector<8x128xf32>
    %56 = tpu.matmul %55, %54, %cst_31 {dimension_numbers = #tpu.dot_dimension_numbers<[1], [0], [0], [1], [0, 0, 1, 1], [], []>} : vector<8x32xf32>, vector<32x128xf32>, vector<8x128xf32> -> vector<8x128xf32>
    %c0_32 = arith.constant 0 : index
    %c0_33 = arith.constant 0 : index
    %57 = vector.load %arg10[%c0_32, %c0_33] : memref<8x128xf32, #tpu.memory_space<vmem>>, vector<8x128xf32>
    %58 = arith.addf %56, %57 : vector<8x128xf32>
    %c0_34 = arith.constant 0 : index
    %c0_35 = arith.constant 0 : index
    %59 = vector.load %arg11[%c0_34, %c0_35] : memref<8x128xf32, #tpu.memory_space<vmem>>, vector<8x128xf32>
    tpu.vector_store %arg11[%c0_34, %c0_35], %58 {strides = array<i32>} : memref<8x128xf32, #tpu.memory_space<vmem>>, vector<8x128xf32>,
    return
  }
  func.func @transform_0(%arg0: i32) -> (i32, i32) {
    %c0_i32 = arith.constant 0 : i32
    %c0_i32_0 = arith.constant 0 : i32
    return %c0_i32, %arg0 : i32, i32
  }
  func.func @transform_1(%arg0: i32) -> (i32, i32) {
    %c0_i32 = arith.constant 0 : i32
    %c0_i32_0 = arith.constant 0 : i32
    %c0_i32_1 = arith.constant 0 : i32
    return %c0_i32, %c0_i32_0 : i32, i32
  }
  func.func @transform_2(%arg0: i32) -> (i32, i32) {
    %c0_i32 = arith.constant 0 : i32
    %c0_i32_0 = arith.constant 0 : i32
    %c0_i32_1 = arith.constant 0 : i32
    return %c0_i32, %c0_i32_0 : i32, i32
  }
  func.func @transform_3(%arg0: i32) -> (i32, i32) {
    %c0_i32 = arith.constant 0 : i32
    %c0_i32_0 = arith.constant 0 : i32
    %c0_i32_1 = arith.constant 0 : i32
    return %c0_i32, %c0_i32_0 : i32, i32
  }
  func.func @transform_4(%arg0: i32) -> (i32, i32) {
    %c0_i32 = arith.constant 0 : i32
    %c0_i32_0 = arith.constant 0 : i32
    %c0_i32_1 = arith.constant 0 : i32
    return %c0_i32, %c0_i32_0 : i32, i32
  }
  func.func @transform_5(%arg0: i32) -> (i32, i32) {
    %c0_i32 = arith.constant 0 : i32
    %c0_i32_0 = arith.constant 0 : i32
    %c0_i32_1 = arith.constant 0 : i32
    return %c0_i32, %c0_i32_0 : i32, i32
  }
  func.func @transform_6(%arg0: i32) -> (i32, i32) {
    %c0_i32 = arith.constant 0 : i32
    %c0_i32_0 = arith.constant 0 : i32
    %c0_i32_1 = arith.constant 0 : i32
    return %c0_i32, %c0_i32_0 : i32, i32
  }
  func.func @transform_7(%arg0: i32) -> (i32, i32) {
    %c0_i32 = arith.constant 0 : i32
    %c0_i32_0 = arith.constant 0 : i32
    %c0_i32_1 = arith.constant 0 : i32
    return %c0_i32, %c0_i32_0 : i32, i32
  }
  func.func @transform_8(%arg0: i32) -> (i32, i32) {
    %c0_i32 = arith.constant 0 : i32
    %c0_i32_0 = arith.constant 0 : i32
    %c0_i32_1 = arith.constant 0 : i32
    return %c0_i32, %c0_i32_0 : i32, i32
  }
  func.func @transform_9(%arg0: i32) -> (i32, i32) {
    %c0_i32 = arith.constant 0 : i32
    %c0_i32_0 = arith.constant 0 : i32
    %c0_i32_1 = arith.constant 0 : i32
    return %c0_i32, %c0_i32_0 : i32, i32
  }
  func.func @transform_10(%arg0: i32) -> (i32, i32) {
    %c0_i32 = arith.constant 0 : i32
    %c0_i32_0 = arith.constant 0 : i32
    return %c0_i32, %arg0 : i32, i32
  }
}

</mosaic_0001>

<llo_original>
// kernel: resnet_forward_pallas.1
$region0: #{resnet_forward_pallas.1}
  #allocation0 [shape = 'u32[]', space=smem, size = 0x4, offset = 0x4, fixed_abs, tag = 'smem constant byte address 0x4 - core index']
  #allocation1 [shape = 'u32[144,128]{1,0:T(1,128)}', space=vmem, size = 0x12000, scoped, tag = 'internal scratch']
  %s0 = inlined_call_operand.vmem [shape: f32[8,128], index: 0, kind: input, shape index: {}]
  %s1 = inlined_call_operand.vmem [shape: f32[96,8], index: 1, kind: input, shape index: {}]
  %s2 = inlined_call_operand.vmem [shape: f32[32,32], index: 2, kind: input, shape index: {}]
  %s3 = inlined_call_operand.vmem [shape: f32[32,32], index: 3, kind: input, shape index: {}]
  %s4 = inlined_call_operand.vmem [shape: f32[32,32], index: 4, kind: input, shape index: {}]
  %s5 = inlined_call_operand.vmem [shape: f32[32,32], index: 5, kind: input, shape index: {}]
  %s6 = inlined_call_operand.vmem [shape: f32[8,32], index: 6, kind: input, shape index: {}]
  %s7 = inlined_call_operand.hbm [shape: f32[32,128], index: 7, kind: input, shape index: {}]
  %s8 = inlined_call_operand.hbm [shape: f32[32,128], index: 8, kind: input, shape index: {}]
  %s9 = inlined_call_operand.hbm [shape: f32[8,128], index: 9, kind: input, shape index: {}]
  %s10 = inlined_call_operand.vmem [shape: f32[8,128], index: 10, kind: output, shape index: {}]
  %s11 = sld [smem:[#allocation0]]
  $region62: #{resnet_forward_pallas.1} parent=0
    _
  %s13 = ssub.s32 1, %s11
  %s14 = scalar_select 0, %s13, %s11
  $region1: #{resnet_forward_pallas.1} parent=0
    #allocation2 [shape = 'u8[16384]{0}', space=vmem, size = 0x4000, scoped, tag = 'input window, operand 7, single buffered']
    #allocation3 [shape = 's32[1]{0}', space=sflag, size = 0x4, scoped, tag = 'scoped memory for resnet_forward_pallas.1']
    #allocation4 [shape = 'u8[16384]{0}', space=vmem, size = 0x4000, scoped, tag = 'input window, operand 8, single buffered']
    #allocation5 [shape = 's32[1]{0}', space=sflag, size = 0x4, scoped, tag = 'scoped memory for resnet_forward_pallas.1']
    #allocation6 [shape = 'u8[4096]{0}', space=vmem, size = 0x1000, scoped, tag = 'input window, operand 9, single buffered']
    %15 = vsyncpa [#allocation3], 0
    %16 = vsyncpa [#allocation5], 0
    // Predicated region
    $region2: #{resnet_forward_pallas.1} parent=1 // pred_check
      _
    $region3: #{resnet_forward_pallas.1} parent=1 // pred_check_branch
      %18 = sbr.rel (0) target = $region5
    $region4: #{resnet_forward_pallas.1} parent=1 // pred_region
      _
    $region5: #{resnet_forward_pallas.1} parent=1 // pred_fallthru
      _
    // Predicated region
    $region6: #{resnet_forward_pallas.1} parent=1 // pred_check
      _
    $region7: #{resnet_forward_pallas.1} parent=1 // pred_check_branch
      %20 = sbr.rel (0) target = $region9
    $region8: #{resnet_forward_pallas.1} parent=1 // pred_region
      _
    $region9: #{resnet_forward_pallas.1} parent=1 // pred_fallthru
      _
    // Predicated region
    $region10: #{resnet_forward_pallas.1} parent=1 // pred_check
      _
    $region11: #{resnet_forward_pallas.1} parent=1 // pred_check_branch
      %22 = sbr.rel (0) target = $region13
    $region12: #{resnet_forward_pallas.1} parent=1 // pred_region
      _
    $region13: #{resnet_forward_pallas.1} parent=1 // pred_fallthru
      _
    // Predicated region
    $region14: #{resnet_forward_pallas.1} parent=1 // pred_check
      _
    $region15: #{resnet_forward_pallas.1} parent=1 // pred_check_branch
      %24 = sbr.rel (0) target = $region17
    $region16: #{resnet_forward_pallas.1} parent=1 // pred_region
      _
    $region17: #{resnet_forward_pallas.1} parent=1 // pred_fallthru
      _
    // Predicated region
    $region18: #{resnet_forward_pallas.1} parent=1 // pred_check
      _
    $region19: #{resnet_forward_pallas.1} parent=1 // pred_check_branch
      %26 = sbr.rel (0) target = $region21
    $region20: #{resnet_forward_pallas.1} parent=1 // pred_region
      _
    $region21: #{resnet_forward_pallas.1} parent=1 // pred_fallthru
      _
    // Predicated region
    $region22: #{resnet_forward_pallas.1} parent=1 // pred_check
      _
    $region23: #{resnet_forward_pallas.1} parent=1 // pred_check_branch
      %28 = sbr.rel (0) target = $region25
    $region24: #{resnet_forward_pallas.1} parent=1 // pred_region
      _
    $region25: #{resnet_forward_pallas.1} parent=1 // pred_fallthru
      _
    // Predicated region
    $region26: #{resnet_forward_pallas.1} parent=1 // pred_check
      _
    $region27: #{resnet_forward_pallas.1} parent=1 // pred_check_branch
      %30 = sbr.rel (0) target = $region29
    $region28: #{resnet_forward_pallas.1} parent=1 // pred_region
      _
    $region29: #{resnet_forward_pallas.1} parent=1 // pred_fallthru
      _
    // Predicated region
    $region30: #{resnet_forward_pallas.1} parent=1 // pred_check
      _
    $region31: #{resnet_forward_pallas.1} parent=1 // pred_check_branch
      %32 = sbr.rel (0) target = $region33
    $region32: #{resnet_forward_pallas.1} parent=1 // pred_region
      %s34 = ssub.s32 512, 512
      %35 = vsyncadd [#allocation3], %s34
      %s36 = sshll.u32 [#allocation2], 4
      %s37 = int_to_ptr.vmem [resolvable:$true] %s36
      %42 = dma.hbm_to_vmem [thread:$0]  %s7, 512, %s37, [#allocation3], 128, 128, 8
    $region33: #{resnet_forward_pallas.1} parent=1 // pred_fallthru
      _
    // Predicated region
    $region34: #{resnet_forward_pallas.1} parent=1 // pred_check
      _
    $region35: #{resnet_forward_pallas.1} parent=1 // pred_check_branch
      %44 = sbr.rel (0) target = $region37
    $region36: #{resnet_forward_pallas.1} parent=1 // pred_region
      %s46 = ssub.s32 512, 512
      %47 = vsyncadd [#allocation5], %s46
      %s48 = sshll.u32 [#allocation4], 4
      %s49 = int_to_ptr.vmem [resolvable:$true] %s48
      %54 = dma.hbm_to_vmem [thread:$0]  %s8, 512, %s49, [#allocation5], 128, 128, 8
    $region37: #{resnet_forward_pallas.1} parent=1 // pred_fallthru
      _
    // Predicated region
    $region38: #{resnet_forward_pallas.1} parent=1 // pred_check
      _
    $region39: #{resnet_forward_pallas.1} parent=1 // pred_check_branch
      %56 = sbr.rel (0) target = $region41
    $region40: #{resnet_forward_pallas.1} parent=1 // pred_region
      %s58 = ssub.s32 128, 128
      %59 = vsyncadd [#allocation5], %s58
      %s61 = sshll.u32 [#allocation6], 4
      %s62 = int_to_ptr.vmem [resolvable:$true] %s61
      %64 = dma.hbm_to_vmem [thread:$0]  %s9, 128, %s62, [#allocation5]
    $region41: #{resnet_forward_pallas.1} parent=1 // pred_fallthru
      _
    // Predicated region
    $region42: #{resnet_forward_pallas.1} parent=1 // pred_check
      _
    $region43: #{resnet_forward_pallas.1} parent=1 // pred_check_branch
      %66 = sbr.rel (0) target = $region45
    $region44: #{resnet_forward_pallas.1} parent=1 // pred_region
      %67 = dma.done [#allocation3], 512
    $region45: #{resnet_forward_pallas.1} parent=1 // pred_fallthru
      _
    // Predicated region
    $region46: #{resnet_forward_pallas.1} parent=1 // pred_check
      _
    $region47: #{resnet_forward_pallas.1} parent=1 // pred_check_branch
      %69 = sbr.rel (0) target = $region49
    $region48: #{resnet_forward_pallas.1} parent=1 // pred_region
      %70 = dma.done [#allocation5], 512
    $region49: #{resnet_forward_pallas.1} parent=1 // pred_fallthru
      _
    // Predicated region
    $region50: #{resnet_forward_pallas.1} parent=1 // pred_check
      _
    $region51: #{resnet_forward_pallas.1} parent=1 // pred_check_branch
      %72 = sbr.rel (0) target = $region53
    $region52: #{resnet_forward_pallas.1} parent=1 // pred_region
      %73 = dma.done [#allocation5], 128
    $region53: #{resnet_forward_pallas.1} parent=1 // pred_fallthru
      _
    %v74 = vld [vmem:[%s0] sm:$0xff]
    %v75 = vld [vmem:[%s1] sm:$0xff]
    %v76 = vld [vmem:[%s1 + $0x8] sm:$0xff]
    %v77 = vld [vmem:[%s1 + $0x10] sm:$0xff]
    %v78 = vld [vmem:[%s1 + $0x18] sm:$0xff]
    %v79 = vld [vmem:[%s1 + $0x20] sm:$0xff]
    %v80 = vld [vmem:[%s1 + $0x28] sm:$0xff]
    %v81 = vld [vmem:[%s1 + $0x30] sm:$0xff]
    %v82 = vld [vmem:[%s1 + $0x38] sm:$0xff]
    %v83 = vld [vmem:[%s1 + $0x40] sm:$0xff]
    %v84 = vld [vmem:[%s1 + $0x48] sm:$0xff]
    %v85 = vld [vmem:[%s1 + $0x50] sm:$0xff]
    %v86 = vld [vmem:[%s1 + $0x58] sm:$0xff]
    %vm87 = vcmask 64512
    %v89 = vsel %vm87, %v75, 0
    %v92 = vsel %vm87, %v76, 0
    %v95 = vsel %vm87, %v77, 0
    %v98 = vsel %vm87, %v78, 0
    %v101 = vsel %vm87, %v79, 0
    %v104 = vsel %vm87, %v80, 0
    %v107 = vsel %vm87, %v81, 0
    %v110 = vsel %vm87, %v82, 0
    %v113 = vsel %vm87, %v83, 0
    %v116 = vsel %vm87, %v84, 0
    %v119 = vsel %vm87, %v85, 0
    %v122 = vsel %vm87, %v86, 0
    %124 = vmatprep.subr.mxu0 0.0
    %125 = vmatpush1.msra.mxu0 %v74
    %126 = vmatprep.subr.mxu0 0.0
    %127 = vmatpush1.msra.mxu0 0.0
    %128 = vmatprep.subr.mxu0 0.0
    %129 = vmatpush1.msra.mxu0 0.0
    %130 = vmatprep.subr.mxu0 0.0
    %131 = vmatpush1.msra.mxu0 0.0
    %132 = vmatprep.subr.mxu0 0.0
    %133 = vmatpush1.msra.mxu0 0.0
    %134 = vmatprep.subr.mxu0 0.0
    %135 = vmatpush1.msra.mxu0 0.0
    %136 = vmatprep.subr.mxu0 0.0
    %137 = vmatpush1.msra.mxu0 0.0
    %138 = vmatprep.subr.mxu0 0.0
    %139 = vmatpush1.msra.mxu0 0.0
    %140 = vmatprep.subr.mxu0 0.0
    %141 = vmatpush1.msra.mxu0 0.0
    %142 = vmatprep.subr.mxu0 0.0
    %143 = vmatpush1.msra.mxu0 0.0
    %144 = vmatprep.subr.mxu0 0.0
    %145 = vmatpush1.msra.mxu0 0.0
    %146 = vmatprep.subr.mxu0 0.0
    %147 = vmatpush1.msra.mxu0 0.0
    %148 = vmatprep.subr.mxu0 0.0
    %149 = vmatpush1.msra.mxu0 0.0
    %150 = vmatprep.subr.mxu0 0.0
    %151 = vmatpush1.msra.mxu0 0.0
    %152 = vmatprep.subr.mxu0 0.0
    %153 = vmatpush1.msra.mxu0 0.0
    %154 = vmatprep.subr.mxu0 0.0
    %155 = vmatpush1.msra.mxu0 0.0
    %156 = vmatprep.subr.mxu0 0.0
    %157 = vmatpush1.msra.mxu0 0.0
    %158 = vmatprep.subr.mxu0 0.0
    %159 = vmatpush1.msra.mxu0 0.0
    %160 = vmatprep.subr.mxu0 0.0
    %161 = vmatpush1.msra.mxu0 0.0
    %162 = vmatprep.subr.mxu0 0.0
    %163 = vmatpush1.msra.mxu0 0.0
    %164 = vmatprep.subr.mxu0 0.0
    %165 = vmatpush1.msra.mxu0 0.0
    %166 = vmatprep.subr.mxu0 0.0
    %167 = vmatpush1.msra.mxu0 0.0
    %168 = vmatprep.subr.mxu0 0.0
    %169 = vmatpush1.msra.mxu0 0.0
    %170 = vmatprep.subr.mxu0 0.0
    %171 = vmatpush1.msra.mxu0 0.0
    %172 = vmatprep.subr.mxu0 0.0
    %173 = vmatpush1.msra.mxu0 0.0
    %174 = vmatprep.subr.mxu0 0.0
    %175 = vmatpush1.msra.mxu0 0.0
    %176 = vmatprep.subr.mxu0 0.0
    %177 = vmatpush1.msra.mxu0 0.0
    %178 = vmatprep.subr.mxu0 0.0
    %179 = vmatpush1.msra.mxu0 0.0
    %180 = vmatprep.subr.mxu0 0.0
    %181 = vmatpush1.msra.mxu0 0.0
    %182 = vmatprep.subr.mxu0 0.0
    %183 = vmatpush1.msra.mxu0 0.0
    %184 = vmatprep.subr.mxu0 0.0
    %185 = vmatpush1.msra.mxu0 0.0
    %186 = vmatprep.subr.mxu0 0.0
    %187 = vmatpush1.msra.mxu0 0.0
    %188 = vmatprep.mubr.f32.mxu0 0.0
    %189 = vmatmul.mubr.f32.gmra.mrb[0].mxu0 %v89
    %v190 = vpop.f32.mrb[0].mxu0
    %v191 = vadd.f32 0.0, %v190
    %v192 = vpop.f32.mrb[0].mxu0
    %193 = vmatprep.mubr.f32.mxu0 0.0
    %194 = vmatmul.mubr.f32.gmra.mrb[0].mxu0 %v92
    %v195 = vpop.f32.mrb[0].mxu0
    %v196 = vadd.f32 0.0, %v195
    %v197 = vpop.f32.mrb[0].mxu0
    %198 = vmatprep.mubr.f32.mxu0 0.0
    %199 = vmatmul.mubr.f32.gmra.mrb[0].mxu0 %v95
    %v200 = vpop.f32.mrb[0].mxu0
    %v201 = vadd.f32 0.0, %v200
    %v202 = vpop.f32.mrb[0].mxu0
    %203 = vmatprep.mubr.f32.mxu0 0.0
    %204 = vmatmul.mubr.f32.gmra.mrb[0].mxu0 %v98
    %v205 = vpop.f32.mrb[0].mxu0
    %v206 = vadd.f32 0.0, %v205
    %v207 = vpop.f32.mrb[0].mxu0
    %208 = vmatprep.mubr.f32.mxu0 0.0
    %209 = vmatmul.mubr.f32.gmra.mrb[0].mxu0 %v101
    %v210 = vpop.f32.mrb[0].mxu0
    %v211 = vadd.f32 0.0, %v210
    %v212 = vpop.f32.mrb[0].mxu0
    %213 = vmatprep.mubr.f32.mxu0 0.0
    %214 = vmatmul.mubr.f32.gmra.mrb[0].mxu0 %v104
    %v215 = vpop.f32.mrb[0].mxu0
    %v216 = vadd.f32 0.0, %v215
    %v217 = vpop.f32.mrb[0].mxu0
    %218 = vmatprep.mubr.f32.mxu0 0.0
    %219 = vmatmul.mubr.f32.gmra.mrb[0].mxu0 %v107
    %v220 = vpop.f32.mrb[0].mxu0
    %v221 = vadd.f32 0.0, %v220
    %v222 = vpop.f32.mrb[0].mxu0
    %223 = vmatprep.mubr.f32.mxu0 0.0
    %224 = vmatmul.mubr.f32.gmra.mrb[0].mxu0 %v110
    %v225 = vpop.f32.mrb[0].mxu0
    %v226 = vadd.f32 0.0, %v225
    %v227 = vpop.f32.mrb[0].mxu0
    %228 = vmatprep.mubr.f32.mxu0 0.0
    %229 = vmatmul.mubr.f32.gmra.mrb[0].mxu0 %v113
    %v230 = vpop.f32.mrb[0].mxu0
    %v231 = vadd.f32 0.0, %v230
    %v232 = vpop.f32.mrb[0].mxu0
    %233 = vmatprep.mubr.f32.mxu0 0.0
    %234 = vmatmul.mubr.f32.gmra.mrb[0].mxu0 %v116
    %v235 = vpop.f32.mrb[0].mxu0
    %v236 = vadd.f32 0.0, %v235
    %v237 = vpop.f32.mrb[0].mxu0
    %238 = vmatprep.mubr.f32.mxu0 0.0
    %239 = vmatmul.mubr.f32.gmra.mrb[0].mxu0 %v119
    %v240 = vpop.f32.mrb[0].mxu0
    %v241 = vadd.f32 0.0, %v240
    %v242 = vpop.f32.mrb[0].mxu0
    %243 = vmatprep.mubr.f32.mxu0 0.0
    %244 = vmatmul.mubr.f32.gmra.mrb[0].mxu0 %v122
    %v245 = vpop.f32.mrb[0].mxu0
    %v246 = vadd.f32 0.0, %v245
    %v247 = vpop.f32.mrb[0].mxu0
    %248 = vdwg.mxu0
    %v249 = vsub.f32 0.0, %v191
    %v250 = vsub.f32 0.0, %v196
    %v251 = vsub.f32 0.0, %v201
    %v252 = vsub.f32 0.0, %v206
    %v253 = vmul.f32 %v249, 1.442695
    %v254 = vpow.pop %v253
    %v255 = vmul.f32 %v250, 1.442695
    %v256 = vpow.pop %v255
    %v257 = vmul.f32 %v251, 1.442695
    %v258 = vpow.pop %v257
    %v259 = vmul.f32 %v252, 1.442695
    %v260 = vpow.pop %v259
    %v261 = vadd.f32 %v254, 1.0
    %v262 = vadd.f32 %v256, 1.0
    %v263 = vadd.f32 %v258, 1.0
    %v264 = vadd.f32 %v260, 1.0
    %v265 = vrcp.pop %v261
    %v266 = vrcp.pop %v262
    %v267 = vrcp.pop %v263
    %v268 = vrcp.pop %v264
    %v269 = vmul.f32 %v191, %v265
    %v270 = vmul.f32 %v196, %v266
    %v271 = vmul.f32 %v201, %v267
    %v272 = vmul.f32 %v206, %v268
    %v273 = vld [vmem:[%s2] sm:$0xff]
    %v274 = vld [vmem:[%s2 + $0x8] sm:$0xff]
    %v275 = vld [vmem:[%s2 + $0x10] sm:$0xff]
    %v276 = vld [vmem:[%s2 + $0x18] sm:$0xff]
    %v277 = vld [vmem:[#allocation2] sm:$0xff]
    %v278 = vld [vmem:[#allocation2 + $0x8] sm:$0xff]
    %v279 = vld [vmem:[#allocation2 + $0x10] sm:$0xff]
    %v280 = vld [vmem:[#allocation2 + $0x18] sm:$0xff]
    %vm281 = vcmask 261120
    %v283 = vsel %vm281, %v273, 0
    %v286 = vsel %vm281, %v274, 0
    %v289 = vsel %vm281, %v275, 0
    %v292 = vsel %vm281, %v276, 0
    %294 = vmatprep.subr.mxu0 0.0
    %295 = vmatpush1.msra.mxu0 %v269
    %296 = vmatprep.subr.mxu0 0.0
    %297 = vmatpush1.msra.mxu0 %v270
    %298 = vmatprep.subr.mxu0 0.0
    %299 = vmatpush1.msra.mxu0 %v271
    %300 = vmatprep.subr.mxu0 0.0
    %301 = vmatpush1.msra.mxu0 %v272
    %302 = vmatprep.subr.mxu0 0.0
    %303 = vmatpush1.msra.mxu0 0.0
    %304 = vmatprep.subr.mxu0 0.0
    %305 = vmatpush1.msra.mxu0 0.0
    %306 = vmatprep.subr.mxu0 0.0
    %307 = vmatpush1.msra.mxu0 0.0
    %308 = vmatprep.subr.mxu0 0.0
    %309 = vmatpush1.msra.mxu0 0.0
    %310 = vmatprep.subr.mxu0 0.0
    %311 = vmatpush1.msra.mxu0 0.0
    %312 = vmatprep.subr.mxu0 0.0
    %313 = vmatpush1.msra.mxu0 0.0
    %314 = vmatprep.subr.mxu0 0.0
    %315 = vmatpush1.msra.mxu0 0.0
    %316 = vmatprep.subr.mxu0 0.0
    %317 = vmatpush1.msra.mxu0 0.0
    %318 = vmatprep.subr.mxu0 0.0
    %319 = vmatpush1.msra.mxu0 0.0
    %320 = vmatprep.subr.mxu0 0.0
    %321 = vmatpush1.msra.mxu0 0.0
    %322 = vmatprep.subr.mxu0 0.0
    %323 = vmatpush1.msra.mxu0 0.0
    %324 = vmatprep.subr.mxu0 0.0
    %325 = vmatpush1.msra.mxu0 0.0
    %326 = vmatprep.subr.mxu0 0.0
    %327 = vmatpush1.msra.mxu0 0.0
    %328 = vmatprep.subr.mxu0 0.0
    %329 = vmatpush1.msra.mxu0 0.0
    %330 = vmatprep.subr.mxu0 0.0
    %331 = vmatpush1.msra.mxu0 0.0
    %332 = vmatprep.subr.mxu0 0.0
    %333 = vmatpush1.msra.mxu0 0.0
    %334 = vmatprep.subr.mxu0 0.0
    %335 = vmatpush1.msra.mxu0 0.0
    %336 = vmatprep.subr.mxu0 0.0
    %337 = vmatpush1.msra.mxu0 0.0
    %338 = vmatprep.subr.mxu0 0.0
    %339 = vmatpush1.msra.mxu0 0.0
    %340 = vmatprep.subr.mxu0 0.0
    %341 = vmatpush1.msra.mxu0 0.0
    %342 = vmatprep.subr.mxu0 0.0
    %343 = vmatpush1.msra.mxu0 0.0
    %344 = vmatprep.subr.mxu0 0.0
    %345 = vmatpush1.msra.mxu0 0.0
    %346 = vmatprep.subr.mxu0 0.0
    %347 = vmatpush1.msra.mxu0 0.0
    %348 = vmatprep.subr.mxu0 0.0
    %349 = vmatpush1.msra.mxu0 0.0
    %350 = vmatprep.subr.mxu0 0.0
    %351 = vmatpush1.msra.mxu0 0.0
    %352 = vmatprep.subr.mxu0 0.0
    %353 = vmatpush1.msra.mxu0 0.0
    %354 = vmatprep.subr.mxu0 0.0
    %355 = vmatpush1.msra.mxu0 0.0
    %356 = vmatprep.subr.mxu0 0.0
    %357 = vmatpush1.msra.mxu0 0.0
    %358 = vmatprep.mubr.f32.mxu0 0.0
    %359 = vmatmul.mubr.f32.gmra.mrb[0].mxu0 %v283
    %v360 = vpop.f32.mrb[0].mxu0
    %v361 = vadd.f32 %v277, %v360
    %v362 = vpop.f32.mrb[0].mxu0
    %363 = vmatprep.mubr.f32.mxu0 0.0
    %364 = vmatmul.mubr.f32.gmra.mrb[0].mxu0 %v286
    %v365 = vpop.f32.mrb[0].mxu0
    %v366 = vadd.f32 %v278, %v365
    %v367 = vpop.f32.mrb[0].mxu0
    %368 = vmatprep.mubr.f32.mxu0 0.0
    %369 = vmatmul.mubr.f32.gmra.mrb[0].mxu0 %v289
    %v370 = vpop.f32.mrb[0].mxu0
    %v371 = vadd.f32 %v279, %v370
    %v372 = vpop.f32.mrb[0].mxu0
    %373 = vmatprep.mubr.f32.mxu0 0.0
    %374 = vmatmul.mubr.f32.gmra.mrb[0].mxu0 %v292
    %v375 = vpop.f32.mrb[0].mxu0
    %v376 = vadd.f32 %v280, %v375
    %v377 = vpop.f32.mrb[0].mxu0
    %378 = vdwg.mxu0
    %v379 = vsub.f32 0.0, %v361
    %v380 = vsub.f32 0.0, %v366
    %v381 = vsub.f32 0.0, %v371
    %v382 = vsub.f32 0.0, %v376
    %v383 = vmul.f32 %v379, 1.442695
    %v384 = vpow.pop %v383
    %v385 = vmul.f32 %v380, 1.442695
    %v386 = vpow.pop %v385
    %v387 = vmul.f32 %v381, 1.442695
    %v388 = vpow.pop %v387
    %v389 = vmul.f32 %v382, 1.442695
    %v390 = vpow.pop %v389
    %v391 = vadd.f32 %v384, 1.0
    %v392 = vadd.f32 %v386, 1.0
    %v393 = vadd.f32 %v388, 1.0
    %v394 = vadd.f32 %v390, 1.0
    %v395 = vrcp.pop %v391
    %v396 = vrcp.pop %v392
    %v397 = vrcp.pop %v393
    %v398 = vrcp.pop %v394
    %v399 = vmul.f32 %v361, %v395
    %v400 = vmul.f32 %v366, %v396
    %v401 = vmul.f32 %v371, %v397
    %v402 = vmul.f32 %v376, %v398
    %v403 = vld [vmem:[%s3] sm:$0xff]
    %v404 = vld [vmem:[%s3 + $0x8] sm:$0xff]
    %v405 = vld [vmem:[%s3 + $0x10] sm:$0xff]
    %v406 = vld [vmem:[%s3 + $0x18] sm:$0xff]
    %v408 = vsel %vm281, %v403, 0
    %v411 = vsel %vm281, %v404, 0
    %v414 = vsel %vm281, %v405, 0
    %v417 = vsel %vm281, %v406, 0
    %419 = vmatprep.subr.mxu0 0.0
    %420 = vmatpush1.msra.mxu0 %v399
    %421 = vmatprep.subr.mxu0 0.0
    %422 = vmatpush1.msra.mxu0 %v400
    %423 = vmatprep.subr.mxu0 0.0
    %424 = vmatpush1.msra.mxu0 %v401
    %425 = vmatprep.subr.mxu0 0.0
    %426 = vmatpush1.msra.mxu0 %v402
    %427 = vmatprep.subr.mxu0 0.0
    %428 = vmatpush1.msra.mxu0 0.0
    %429 = vmatprep.subr.mxu0 0.0
    %430 = vmatpush1.msra.mxu0 0.0
    %431 = vmatprep.subr.mxu0 0.0
    %432 = vmatpush1.msra.mxu0 0.0
    %433 = vmatprep.subr.mxu0 0.0
    %434 = vmatpush1.msra.mxu0 0.0
    %435 = vmatprep.subr.mxu0 0.0
    %436 = vmatpush1.msra.mxu0 0.0
    %437 = vmatprep.subr.mxu0 0.0
    %438 = vmatpush1.msra.mxu0 0.0
    %439 = vmatprep.subr.mxu0 0.0
    %440 = vmatpush1.msra.mxu0 0.0
    %441 = vmatprep.subr.mxu0 0.0
    %442 = vmatpush1.msra.mxu0 0.0
    %443 = vmatprep.subr.mxu0 0.0
    %444 = vmatpush1.msra.mxu0 0.0
    %445 = vmatprep.subr.mxu0 0.0
    %446 = vmatpush1.msra.mxu0 0.0
    %447 = vmatprep.subr.mxu0 0.0
    %448 = vmatpush1.msra.mxu0 0.0
    %449 = vmatprep.subr.mxu0 0.0
    %450 = vmatpush1.msra.mxu0 0.0
    %451 = vmatprep.subr.mxu0 0.0
    %452 = vmatpush1.msra.mxu0 0.0
    %453 = vmatprep.subr.mxu0 0.0
    %454 = vmatpush1.msra.mxu0 0.0
    %455 = vmatprep.subr.mxu0 0.0
    %456 = vmatpush1.msra.mxu0 0.0
    %457 = vmatprep.subr.mxu0 0.0
    %458 = vmatpush1.msra.mxu0 0.0
    %459 = vmatprep.subr.mxu0 0.0
    %460 = vmatpush1.msra.mxu0 0.0
    %461 = vmatprep.subr.mxu0 0.0
    %462 = vmatpush1.msra.mxu0 0.0
    %463 = vmatprep.subr.mxu0 0.0
    %464 = vmatpush1.msra.mxu0 0.0
    %465 = vmatprep.subr.mxu0 0.0
    %466 = vmatpush1.msra.mxu0 0.0
    %467 = vmatprep.subr.mxu0 0.0
    %468 = vmatpush1.msra.mxu0 0.0
    %469 = vmatprep.subr.mxu0 0.0
    %470 = vmatpush1.msra.mxu0 0.0
    %471 = vmatprep.subr.mxu0 0.0
    %472 = vmatpush1.msra.mxu0 0.0
    %473 = vmatprep.subr.mxu0 0.0
    %474 = vmatpush1.msra.mxu0 0.0
    %475 = vmatprep.subr.mxu0 0.0
    %476 = vmatpush1.msra.mxu0 0.0
    %477 = vmatprep.subr.mxu0 0.0
    %478 = vmatpush1.msra.mxu0 0.0
    %479 = vmatprep.subr.mxu0 0.0
    %480 = vmatpush1.msra.mxu0 0.0
    %481 = vmatprep.subr.mxu0 0.0
    %482 = vmatpush1.msra.mxu0 0.0
    %483 = vmatprep.mubr.f32.mxu0 0.0
    %484 = vmatmul.mubr.f32.gmra.mrb[0].mxu0 %v408
    %v485 = vpop.f32.mrb[0].mxu0
    %v486 = vadd.f32 %v211, %v485
    %v487 = vpop.f32.mrb[0].mxu0
    %488 = vmatprep.mubr.f32.mxu0 0.0
    %489 = vmatmul.mubr.f32.gmra.mrb[0].mxu0 %v411
    %v490 = vpop.f32.mrb[0].mxu0
    %v491 = vadd.f32 %v216, %v490
    %v492 = vpop.f32.mrb[0].mxu0
    %493 = vmatprep.mubr.f32.mxu0 0.0
    %494 = vmatmul.mubr.f32.gmra.mrb[0].mxu0 %v414
    %v495 = vpop.f32.mrb[0].mxu0
    %v496 = vadd.f32 %v221, %v495
    %v497 = vpop.f32.mrb[0].mxu0
    %498 = vmatprep.mubr.f32.mxu0 0.0
    %499 = vmatmul.mubr.f32.gmra.mrb[0].mxu0 %v417
    %v500 = vpop.f32.mrb[0].mxu0
    %v501 = vadd.f32 %v226, %v500
    %v502 = vpop.f32.mrb[0].mxu0
    %503 = vdwg.mxu0
    %v504 = vsub.f32 0.0, %v486
    %v505 = vsub.f32 0.0, %v491
    %v506 = vsub.f32 0.0, %v496
    %v507 = vsub.f32 0.0, %v501
    %v508 = vmul.f32 %v504, 1.442695
    %v509 = vpow.pop %v508
    %v510 = vmul.f32 %v505, 1.442695
    %v511 = vpow.pop %v510
    %v512 = vmul.f32 %v506, 1.442695
    %v513 = vpow.pop %v512
    %v514 = vmul.f32 %v507, 1.442695
    %v515 = vpow.pop %v514
    %v516 = vadd.f32 %v509, 1.0
    %v517 = vadd.f32 %v511, 1.0
    %v518 = vadd.f32 %v513, 1.0
    %v519 = vadd.f32 %v515, 1.0
    %v520 = vrcp.pop %v516
    %v521 = vrcp.pop %v517
    %v522 = vrcp.pop %v518
    %v523 = vrcp.pop %v519
    %v524 = vmul.f32 %v486, %v520
    %v525 = vmul.f32 %v491, %v521
    %v526 = vmul.f32 %v496, %v522
    %v527 = vmul.f32 %v501, %v523
    %v528 = vld [vmem:[%s4] sm:$0xff]
    %v529 = vld [vmem:[%s4 + $0x8] sm:$0xff]
    %v530 = vld [vmem:[%s4 + $0x10] sm:$0xff]
    %v531 = vld [vmem:[%s4 + $0x18] sm:$0xff]
    %v532 = vld [vmem:[#allocation4] sm:$0xff]
    %v533 = vld [vmem:[#allocation4 + $0x8] sm:$0xff]
    %v534 = vld [vmem:[#allocation4 + $0x10] sm:$0xff]
    %v535 = vld [vmem:[#allocation4 + $0x18] sm:$0xff]
    %v537 = vsel %vm281, %v528, 0
    %v540 = vsel %vm281, %v529, 0
    %v543 = vsel %vm281, %v530, 0
    %v546 = vsel %vm281, %v531, 0
    %548 = vmatprep.subr.mxu0 0.0
    %549 = vmatpush1.msra.mxu0 %v524
    %550 = vmatprep.subr.mxu0 0.0
    %551 = vmatpush1.msra.mxu0 %v525
    %552 = vmatprep.subr.mxu0 0.0
    %553 = vmatpush1.msra.mxu0 %v526
    %554 = vmatprep.subr.mxu0 0.0
    %555 = vmatpush1.msra.mxu0 %v527
    %556 = vmatprep.subr.mxu0 0.0
    %557 = vmatpush1.msra.mxu0 0.0
    %558 = vmatprep.subr.mxu0 0.0
    %559 = vmatpush1.msra.mxu0 0.0
    %560 = vmatprep.subr.mxu0 0.0
    %561 = vmatpush1.msra.mxu0 0.0
    %562 = vmatprep.subr.mxu0 0.0
    %563 = vmatpush1.msra.mxu0 0.0
    %564 = vmatprep.subr.mxu0 0.0
    %565 = vmatpush1.msra.mxu0 0.0
    %566 = vmatprep.subr.mxu0 0.0
    %567 = vmatpush1.msra.mxu0 0.0
    %568 = vmatprep.subr.mxu0 0.0
    %569 = vmatpush1.msra.mxu0 0.0
    %570 = vmatprep.subr.mxu0 0.0
    %571 = vmatpush1.msra.mxu0 0.0
    %572 = vmatprep.subr.mxu0 0.0
    %573 = vmatpush1.msra.mxu0 0.0
    %574 = vmatprep.subr.mxu0 0.0
    %575 = vmatpush1.msra.mxu0 0.0
    %576 = vmatprep.subr.mxu0 0.0
    %577 = vmatpush1.msra.mxu0 0.0
    %578 = vmatprep.subr.mxu0 0.0
    %579 = vmatpush1.msra.mxu0 0.0
    %580 = vmatprep.subr.mxu0 0.0
    %581 = vmatpush1.msra.mxu0 0.0
    %582 = vmatprep.subr.mxu0 0.0
    %583 = vmatpush1.msra.mxu0 0.0
    %584 = vmatprep.subr.mxu0 0.0
    %585 = vmatpush1.msra.mxu0 0.0
    %586 = vmatprep.subr.mxu0 0.0
    %587 = vmatpush1.msra.mxu0 0.0
    %588 = vmatprep.subr.mxu0 0.0
    %589 = vmatpush1.msra.mxu0 0.0
    %590 = vmatprep.subr.mxu0 0.0
    %591 = vmatpush1.msra.mxu0 0.0
    %592 = vmatprep.subr.mxu0 0.0
    %593 = vmatpush1.msra.mxu0 0.0
    %594 = vmatprep.subr.mxu0 0.0
    %595 = vmatpush1.msra.mxu0 0.0
    %596 = vmatprep.subr.mxu0 0.0
    %597 = vmatpush1.msra.mxu0 0.0
    %598 = vmatprep.subr.mxu0 0.0
    %599 = vmatpush1.msra.mxu0 0.0
    %600 = vmatprep.subr.mxu0 0.0
    %601 = vmatpush1.msra.mxu0 0.0
    %602 = vmatprep.subr.mxu0 0.0
    %603 = vmatpush1.msra.mxu0 0.0
    %604 = vmatprep.subr.mxu0 0.0
    %605 = vmatpush1.msra.mxu0 0.0
    %606 = vmatprep.subr.mxu0 0.0
    %607 = vmatpush1.msra.mxu0 0.0
    %608 = vmatprep.subr.mxu0 0.0
    %609 = vmatpush1.msra.mxu0 0.0
    %610 = vmatprep.subr.mxu0 0.0
    %611 = vmatpush1.msra.mxu0 0.0
    %612 = vmatprep.mubr.f32.mxu0 0.0
    %613 = vmatmul.mubr.f32.gmra.mrb[0].mxu0 %v537
    %v614 = vpop.f32.mrb[0].mxu0
    %v615 = vadd.f32 %v532, %v614
    %v616 = vpop.f32.mrb[0].mxu0
    %617 = vmatprep.mubr.f32.mxu0 0.0
    %618 = vmatmul.mubr.f32.gmra.mrb[0].mxu0 %v540
    %v619 = vpop.f32.mrb[0].mxu0
    %v620 = vadd.f32 %v533, %v619
    %v621 = vpop.f32.mrb[0].mxu0
    %622 = vmatprep.mubr.f32.mxu0 0.0
    %623 = vmatmul.mubr.f32.gmra.mrb[0].mxu0 %v543
    %v624 = vpop.f32.mrb[0].mxu0
    %v625 = vadd.f32 %v534, %v624
    %v626 = vpop.f32.mrb[0].mxu0
    %627 = vmatprep.mubr.f32.mxu0 0.0
    %628 = vmatmul.mubr.f32.gmra.mrb[0].mxu0 %v546
    %v629 = vpop.f32.mrb[0].mxu0
    %v630 = vadd.f32 %v535, %v629
    %v631 = vpop.f32.mrb[0].mxu0
    %632 = vdwg.mxu0
    %v633 = vsub.f32 0.0, %v615
    %v634 = vsub.f32 0.0, %v620
    %v635 = vsub.f32 0.0, %v625
    %v636 = vsub.f32 0.0, %v630
    %v637 = vmul.f32 %v633, 1.442695
    %v638 = vpow.pop %v637
    %v639 = vmul.f32 %v634, 1.442695
    %v640 = vpow.pop %v639
    %v641 = vmul.f32 %v635, 1.442695
    %v642 = vpow.pop %v641
    %v643 = vmul.f32 %v636, 1.442695
    %v644 = vpow.pop %v643
    %v645 = vadd.f32 %v638, 1.0
    %v646 = vadd.f32 %v640, 1.0
    %v647 = vadd.f32 %v642, 1.0
    %v648 = vadd.f32 %v644, 1.0
    %v649 = vrcp.pop %v645
    %v650 = vrcp.pop %v646
    %v651 = vrcp.pop %v647
    %v652 = vrcp.pop %v648
    %v653 = vmul.f32 %v615, %v649
    %v654 = vmul.f32 %v620, %v650
    %v655 = vmul.f32 %v625, %v651
    %v656 = vmul.f32 %v630, %v652
    %v657 = vld [vmem:[%s5] sm:$0xff]
    %v658 = vld [vmem:[%s5 + $0x8] sm:$0xff]
    %v659 = vld [vmem:[%s5 + $0x10] sm:$0xff]
    %v660 = vld [vmem:[%s5 + $0x18] sm:$0xff]
    %v662 = vsel %vm281, %v657, 0
    %v665 = vsel %vm281, %v658, 0
    %v668 = vsel %vm281, %v659, 0
    %v671 = vsel %vm281, %v660, 0
    %673 = vmatprep.subr.mxu0 0.0
    %674 = vmatpush1.msra.mxu0 %v653
    %675 = vmatprep.subr.mxu0 0.0
    %676 = vmatpush1.msra.mxu0 %v654
    %677 = vmatprep.subr.mxu0 0.0
    %678 = vmatpush1.msra.mxu0 %v655
    %679 = vmatprep.subr.mxu0 0.0
    %680 = vmatpush1.msra.mxu0 %v656
    %681 = vmatprep.subr.mxu0 0.0
    %682 = vmatpush1.msra.mxu0 0.0
    %683 = vmatprep.subr.mxu0 0.0
    %684 = vmatpush1.msra.mxu0 0.0
    %685 = vmatprep.subr.mxu0 0.0
    %686 = vmatpush1.msra.mxu0 0.0
    %687 = vmatprep.subr.mxu0 0.0
    %688 = vmatpush1.msra.mxu0 0.0
    %689 = vmatprep.subr.mxu0 0.0
    %690 = vmatpush1.msra.mxu0 0.0
    %691 = vmatprep.subr.mxu0 0.0
    %692 = vmatpush1.msra.mxu0 0.0
    %693 = vmatprep.subr.mxu0 0.0
    %694 = vmatpush1.msra.mxu0 0.0
    %695 = vmatprep.subr.mxu0 0.0
    %696 = vmatpush1.msra.mxu0 0.0
    %697 = vmatprep.subr.mxu0 0.0
    %698 = vmatpush1.msra.mxu0 0.0
    %699 = vmatprep.subr.mxu0 0.0
    %700 = vmatpush1.msra.mxu0 0.0
    %701 = vmatprep.subr.mxu0 0.0
    %702 = vmatpush1.msra.mxu0 0.0
    %703 = vmatprep.subr.mxu0 0.0
    %704 = vmatpush1.msra.mxu0 0.0
    %705 = vmatprep.subr.mxu0 0.0
    %706 = vmatpush1.msra.mxu0 0.0
    %707 = vmatprep.subr.mxu0 0.0
    %708 = vmatpush1.msra.mxu0 0.0
    %709 = vmatprep.subr.mxu0 0.0
    %710 = vmatpush1.msra.mxu0 0.0
    %711 = vmatprep.subr.mxu0 0.0
    %712 = vmatpush1.msra.mxu0 0.0
    %713 = vmatprep.subr.mxu0 0.0
    %714 = vmatpush1.msra.mxu0 0.0
    %715 = vmatprep.subr.mxu0 0.0
    %716 = vmatpush1.msra.mxu0 0.0
    %717 = vmatprep.subr.mxu0 0.0
    %718 = vmatpush1.msra.mxu0 0.0
    %719 = vmatprep.subr.mxu0 0.0
    %720 = vmatpush1.msra.mxu0 0.0
    %721 = vmatprep.subr.mxu0 0.0
    %722 = vmatpush1.msra.mxu0 0.0
    %723 = vmatprep.subr.mxu0 0.0
    %724 = vmatpush1.msra.mxu0 0.0
    %725 = vmatprep.subr.mxu0 0.0
    %726 = vmatpush1.msra.mxu0 0.0
    %727 = vmatprep.subr.mxu0 0.0
    %728 = vmatpush1.msra.mxu0 0.0
    %729 = vmatprep.subr.mxu0 0.0
    %730 = vmatpush1.msra.mxu0 0.0
    %731 = vmatprep.subr.mxu0 0.0
    %732 = vmatpush1.msra.mxu0 0.0
    %733 = vmatprep.subr.mxu0 0.0
    %734 = vmatpush1.msra.mxu0 0.0
    %735 = vmatprep.subr.mxu0 0.0
    %736 = vmatpush1.msra.mxu0 0.0
    %737 = vmatprep.mubr.f32.mxu0 0.0
    %738 = vmatmul.mubr.f32.gmra.mrb[0].mxu0 %v662
    %v739 = vpop.f32.mrb[0].mxu0
    %v740 = vadd.f32 %v231, %v739
    %v741 = vpop.f32.mrb[0].mxu0
    %742 = vmatprep.mubr.f32.mxu0 0.0
    %743 = vmatmul.mubr.f32.gmra.mrb[0].mxu0 %v665
    %v744 = vpop.f32.mrb[0].mxu0
    %v745 = vadd.f32 %v236, %v744
    %v746 = vpop.f32.mrb[0].mxu0
    %747 = vmatprep.mubr.f32.mxu0 0.0
    %748 = vmatmul.mubr.f32.gmra.mrb[0].mxu0 %v668
    %v749 = vpop.f32.mrb[0].mxu0
    %v750 = vadd.f32 %v241, %v749
    %v751 = vpop.f32.mrb[0].mxu0
    %752 = vmatprep.mubr.f32.mxu0 0.0
    %753 = vmatmul.mubr.f32.gmra.mrb[0].mxu0 %v671
    %v754 = vpop.f32.mrb[0].mxu0
    %v755 = vadd.f32 %v246, %v754
    %v756 = vpop.f32.mrb[0].mxu0
    %757 = vdwg.mxu0
    %v758 = vsub.f32 0.0, %v740
    %v759 = vsub.f32 0.0, %v745
    %v760 = vsub.f32 0.0, %v750
    %v761 = vsub.f32 0.0, %v755
    %v762 = vmul.f32 %v758, 1.442695
    %v763 = vpow.pop %v762
    %v764 = vmul.f32 %v759, 1.442695
    %v765 = vpow.pop %v764
    %v766 = vmul.f32 %v760, 1.442695
    %v767 = vpow.pop %v766
    %v768 = vmul.f32 %v761, 1.442695
    %v769 = vpow.pop %v768
    %v770 = vadd.f32 %v763, 1.0
    %v771 = vadd.f32 %v765, 1.0
    %v772 = vadd.f32 %v767, 1.0
    %v773 = vadd.f32 %v769, 1.0
    %v774 = vrcp.pop %v770
    %v775 = vrcp.pop %v771
    %v776 = vrcp.pop %v772
    %v777 = vrcp.pop %v773
    %v778 = vmul.f32 %v740, %v774
    %v779 = vmul.f32 %v745, %v775
    %v780 = vmul.f32 %v750, %v776
    %v781 = vmul.f32 %v755, %v777
    %v782 = vld [vmem:[%s6] sm:$0xff]
    %v783 = vld [vmem:[#allocation6] sm:$0xff]
    %v785 = vsel %vm281, %v782, 0
    %787 = vmatprep.subr.mxu0 0.0
    %788 = vmatpush1.msra.mxu0 %v778
    %789 = vmatprep.subr.mxu0 0.0
    %790 = vmatpush1.msra.mxu0 %v779
    %791 = vmatprep.subr.mxu0 0.0
    %792 = vmatpush1.msra.mxu0 %v780
    %793 = vmatprep.subr.mxu0 0.0
    %794 = vmatpush1.msra.mxu0 %v781
    %795 = vmatprep.subr.mxu0 0.0
    %796 = vmatpush1.msra.mxu0 0.0
    %797 = vmatprep.subr.mxu0 0.0
    %798 = vmatpush1.msra.mxu0 0.0
    %799 = vmatprep.subr.mxu0 0.0
    %800 = vmatpush1.msra.mxu0 0.0
    %801 = vmatprep.subr.mxu0 0.0
    %802 = vmatpush1.msra.mxu0 0.0
    %803 = vmatprep.subr.mxu0 0.0
    %804 = vmatpush1.msra.mxu0 0.0
    %805 = vmatprep.subr.mxu0 0.0
    %806 = vmatpush1.msra.mxu0 0.0
    %807 = vmatprep.subr.mxu0 0.0
    %808 = vmatpush1.msra.mxu0 0.0
    %809 = vmatprep.subr.mxu0 0.0
    %810 = vmatpush1.msra.mxu0 0.0
    %811 = vmatprep.subr.mxu0 0.0
    %812 = vmatpush1.msra.mxu0 0.0
    %813 = vmatprep.subr.mxu0 0.0
    %814 = vmatpush1.msra.mxu0 0.0
    %815 = vmatprep.subr.mxu0 0.0
    %816 = vmatpush1.msra.mxu0 0.0
    %817 = vmatprep.subr.mxu0 0.0
    %818 = vmatpush1.msra.mxu0 0.0
    %819 = vmatprep.subr.mxu0 0.0
    %820 = vmatpush1.msra.mxu0 0.0
    %821 = vmatprep.subr.mxu0 0.0
    %822 = vmatpush1.msra.mxu0 0.0
    %823 = vmatprep.subr.mxu0 0.0
    %824 = vmatpush1.msra.mxu0 0.0
    %825 = vmatprep.subr.mxu0 0.0
    %826 = vmatpush1.msra.mxu0 0.0
    %827 = vmatprep.subr.mxu0 0.0
    %828 = vmatpush1.msra.mxu0 0.0
    %829 = vmatprep.subr.mxu0 0.0
    %830 = vmatpush1.msra.mxu0 0.0
    %831 = vmatprep.subr.mxu0 0.0
    %832 = vmatpush1.msra.mxu0 0.0
    %833 = vmatprep.subr.mxu0 0.0
    %834 = vmatpush1.msra.mxu0 0.0
    %835 = vmatprep.subr.mxu0 0.0
    %836 = vmatpush1.msra.mxu0 0.0
    %837 = vmatprep.subr.mxu0 0.0
    %838 = vmatpush1.msra.mxu0 0.0
    %839 = vmatprep.subr.mxu0 0.0
    %840 = vmatpush1.msra.mxu0 0.0
    %841 = vmatprep.subr.mxu0 0.0
    %842 = vmatpush1.msra.mxu0 0.0
    %843 = vmatprep.subr.mxu0 0.0
    %844 = vmatpush1.msra.mxu0 0.0
    %845 = vmatprep.subr.mxu0 0.0
    %846 = vmatpush1.msra.mxu0 0.0
    %847 = vmatprep.subr.mxu0 0.0
    %848 = vmatpush1.msra.mxu0 0.0
    %849 = vmatprep.subr.mxu0 0.0
    %850 = vmatpush1.msra.mxu0 0.0
    %851 = vmatprep.mubr.f32.mxu0 0.0
    %852 = vmatmul.mubr.f32.gmra.mrb[0].mxu0 %v785
    %v853 = vpop.f32.mrb[0].mxu0
    %v854 = vadd.f32 %v783, %v853
    %v855 = vpop.f32.mrb[0].mxu0
    %856 = vdwg.mxu0
    %857 = vst [vmem:[%s10] sm:$0xff] %v854
    // Predicated region
    $region54: #{resnet_forward_pallas.1} parent=1 // pred_check
      _
    $region55: #{resnet_forward_pallas.1} parent=1 // pred_check_branch
      %859 = sbr.rel (0) target = $region57
    $region56: #{resnet_forward_pallas.1} parent=1 // pred_region
      _
    $region57: #{resnet_forward_pallas.1} parent=1 // pred_fallthru
      _
    // Predicated region
    $region58: #{resnet_forward_pallas.1} parent=1 // pred_check
      _
    $region59: #{resnet_forward_pallas.1} parent=1 // pred_check_branch
      %861 = sbr.rel (0) target = $region61
    $region60: #{resnet_forward_pallas.1} parent=1 // pred_region
      _
    $region61: #{resnet_forward_pallas.1} parent=1 // pred_fallthru
      _
    %862 = vsyncpa [#allocation3], 1
    %863 = vsyncpa [#allocation5], 1

</llo_original>
